<compile_context>
chip_gen: v6e
topology: v6e:2x2x1
jax: 0.10.0
libtpu: 0.0.40
codegen_flags: <defaults>
</compile_context>

<pallas_src>
import jax
import jax.numpy as jnp
from jax.experimental import pallas as pl
from jax.experimental.pallas import tpu as pltpu

LANE = 128        # TPU lane width; the hidden dim is zero-padded to this.
B_ALIGN = 16      # batch-tile alignment (bf16 sublane packing).
B_TARGET = 512    # preferred batch tile (all matmuls [b_tile,128]x[128,128]).


def _ceil_to(x, m):
    return ((x + m - 1) // m) * m


def _pad_to(x, shape):
    return jnp.pad(x, [(0, t - s) for s, t in zip(x.shape, shape)])


def _pick_batch_tiling(B):
    """Large batch tiles (MXU fill / per-step overhead amortization), and >= 2
    grid tiles whenever the batch permits so v7x's two TensorCores both get
    work under dimension_semantics=("parallel",)."""
    bp_min = _ceil_to(B, B_ALIGN)
    if bp_min <= 2 * B_ALIGN:
        b_tile = bp_min                                   # tiny batch: one tile
    else:
        b_tile = min(B_TARGET, _ceil_to((bp_min + 1) // 2, B_ALIGN))
    return b_tile, _ceil_to(B, b_tile)


# ----------------------------------------------------------------------------
# Pallas kernel: text FCNet (4 x weight-norm Linear + ReLU) followed by the
# classifier (WN-Linear(H,H) + ReLU, WN-Linear(H,1) as a lane reduction).
# One batch tile per grid step; weights replicated across the grid.
# ----------------------------------------------------------------------------
def main_model_kernel(
    q_ref,      # [B_TILE, T]   bf16  text features (T unpadded; Mosaic pads K)
    tw0_ref,    # [T, H]        bf16  text FCNet layer 0
    tb0_ref,    # [1, H]        f32
    twr_ref,    # [3, H, H]     bf16  text FCNet layers 1..3
    tbr_ref,    # [3, 1, H]     f32
    cw0_ref,    # [H, H]        bf16  classifier Linear(H,H)
    cb0_ref,    # [1, H]        f32
    cw1_ref,    # [1, H]        f32   classifier head Linear(H,1) as row vector
    cb1_ref,    # [1, 1]        f32
    out_ref,    # [B_TILE, 1]   f32   classifier logits
):
    # ---- text FCNet: 4 x (weight-norm Linear + ReLU); dropout = identity ----
    t = jnp.maximum(
        jnp.dot(q_ref[...], tw0_ref[...], preferred_element_type=jnp.float32)
        + tb0_ref[...], 0.0)
    for i in range(3):                                   # static unroll
        t = jnp.maximum(
            jnp.dot(t.astype(jnp.bfloat16), twr_ref[i],
                    preferred_element_type=jnp.float32) + tbr_ref[i], 0.0)

    # ---- classifier: WN-Linear(H,H) + ReLU, then WN-Linear(H,1) as a
    #      VPU multiply + lane reduction (no 1-wide MXU matmul). ------------
    c = jnp.maximum(
        jnp.dot(t.astype(jnp.bfloat16), cw0_ref[...],
                preferred_element_type=jnp.float32) + cb0_ref[...], 0.0)
    out_ref[...] = (jnp.sum(c * cw1_ref[...], axis=-1, keepdims=True)
                    + cb1_ref[...])


# ----------------------------------------------------------------------------
# Plain-JAX glue: parameter construction (weight_norm folding), one-time
# host-side padding/packing, and the pallas_call wrapper.
# ----------------------------------------------------------------------------
def _wn_linear(key, in_dim, out_dim):
    """weight_norm(nn.Linear(in,out), dim=None): W = g * V / ||V||_F, folded.

    Returns (W_T, b) with W_T shaped [in_dim, out_dim], b shaped [1, out_dim].
    """
    kv, kb = jax.random.split(key)
    v = jax.random.normal(kv, (out_dim, in_dim), jnp.float32) * 0.1
    g = jnp.float32(1.0)
    w = g * v / jnp.sqrt(jnp.sum(v * v) + 1e-12)
    b = jax.random.normal(kb, (out_dim,), jnp.float32) * 0.01
    return w.T, b[None, :]


def init_params(key, vision_dim, token_dim, num_hidden):
    """Logical (unpadded) parameters mirroring the PyTorch module.  The
    attention / vision-FCNet parameters exist here for structural fidelity but
    are dead w.r.t. the returned tensor and never reach the kernel."""
    V, T, H = vision_dim, token_dim, num_hidden
    keys = jax.random.split(key, 12)
    p = {}
    # Attention: FCNet([V+T, H]) -> weight_norm Linear(H, 1)      (dead branch)
    w, b = _wn_linear(keys[0], V + T, H)
    p["aw1v"], p["aw1t"], p["ab1"] = w[:V], w[V:], b
    p["aw2"], p["ab2"] = _wn_linear(keys[1], H, 1)
    # vision FCNet([V,H,H,H,H])                                   (dead branch)
    p["vw0"], p["vb0"] = _wn_linear(keys[2], V, H)
    ws, bs = zip(*[_wn_linear(keys[3 + i], H, H) for i in range(3)])
    p["vwr"], p["vbr"] = jnp.stack(ws), jnp.stack(bs)
    # text FCNet([T,H,H,H,H])                                     (live)
    p["tw0"], p["tb0"] = _wn_linear(keys[6], T, H)
    ws, bs = zip(*[_wn_linear(keys[7 + i], H, H) for i in range(3)])
    p["twr"], p["tbr"] = jnp.stack(ws), jnp.stack(bs)
    # classifier                                                  (live)
    p["cw0"], p["cb0"] = _wn_linear(keys[10], H, H)
    p["cw1"], p["cb1"] = _wn_linear(keys[11], H, 1)
    return p


def prepare_params(params):
    """One-time host-side packing of the LIVE parameters only: zero-pad the
    hidden dim to the 128-lane width (padded lanes stay exactly zero through
    the ReLU chain because weight/bias pads are zero), turn the Linear(H,1)
    head into a [1,H] row vector, and cast MXU weights to bf16 (f32 accum)."""
    T = params["tw0"].shape[0]
    H = params["tb0"].shape[1]
    Hp = _ceil_to(H, LANE)
    bf16 = jnp.bfloat16
    return {
        "tw0": _pad_to(params["tw0"], (T, Hp)).astype(bf16),
        "tb0": _pad_to(params["tb0"], (1, Hp)),
        "twr": _pad_to(params["twr"], (3, Hp, Hp)).astype(bf16),
        "tbr": _pad_to(params["tbr"], (3, 1, Hp)),
        "cw0": _pad_to(params["cw0"], (Hp, Hp)).astype(bf16),
        "cb0": _pad_to(params["cb0"], (1, Hp)),
        "cw1": _pad_to(params["cw1"].T, (1, Hp)),        # head as row vector
        "cb1": params["cb1"],                            # [1, 1]
    }


def main_model_forward(vision_feat, words_feat, kp):
    """vision_feat: [B, N_obj, V], words_feat: [B, T]  ->  logits [B, 1].

    `vision_feat` is accepted for interface fidelity with the PyTorch module
    but is dead w.r.t. the returned tensor (combined_feat = meme_feat in the
    reference forward), so it is never touched here (performance review #1).
    """
    del vision_feat
    B, T = words_feat.shape
    Hp = kp["tb0"].shape[1]

    # Batch tiling: big tiles, >= 2 grid tiles when batch permits (v7x 2 TCs).
    b_tile, Bp = _pick_batch_tiling(B)

    # Pad only the batch dim; leave the contraction dim T unpadded (full-dim
    # block is legal, Mosaic pads K in VMEM) and cast MXU input to bf16.
    q = _pad_to(words_feat, (Bp, T)).astype(jnp.bfloat16)

    def rep(shape):  # grid-invariant (replicated) parameter block
        return pl.BlockSpec(shape, lambda i: (0,) * len(shape),
                            memory_space=pltpu.MemorySpace.VMEM)

    in_specs = [
        pl.BlockSpec((b_tile, T), lambda i: (i, 0),
                     memory_space=pltpu.MemorySpace.VMEM),           # text
        rep((T, Hp)), rep((1, Hp)), rep((3, Hp, Hp)), rep((3, 1, Hp)),  # FCNet
        rep((Hp, Hp)), rep((1, Hp)), rep((1, Hp)), rep((1, 1)),      # classifier
    ]
    # Minimal writeback: one f32 logit per row (4 B/row), last-dim-1 block.
    out_specs = pl.BlockSpec((b_tile, 1), lambda i: (i, 0),
                             memory_space=pltpu.MemorySpace.VMEM)
    out_shape = jax.ShapeDtypeStruct((Bp, 1), jnp.float32)

    out = pl.pallas_call(
        main_model_kernel,
        grid=(Bp // b_tile,),
        in_specs=in_specs,
        out_specs=out_specs,
        out_shape=out_shape,
        compiler_params=pltpu.CompilerParams(
            dimension_semantics=("parallel",)),
    )(
        q,
        kp["tw0"], kp["tb0"], kp["twr"], kp["tbr"],
        kp["cw0"], kp["cb0"], kp["cw1"], kp["cb1"],
    )
    return out[:B]


if __name__ == "__main__":
    B, N_OBJ, V_DIM, T_DIM, H = 2, 8, 32, 32, 32

    root = jax.random.PRNGKey(0)
    k_vis, k_txt, k_par = jax.random.split(root, 3)

    vision_feat = jax.random.normal(k_vis, (B, N_OBJ, V_DIM), jnp.float32)
    words_feat = jax.random.normal(k_txt, (B, T_DIM), jnp.float32)

    params = init_params(k_par, V_DIM, T_DIM, H)
    kernel_params = prepare_params(params)     # one-time pad/cast/pack

    fwd = jax.jit(main_model_forward)
    out = fwd(vision_feat, words_feat, kernel_params)
    out = jax.block_until_ready(out)
    assert out.shape == (B, 1) and out.dtype == jnp.float32
    print("KERNEL_OK")
</pallas_src>

<mosaic_0001>
module attributes {stable_mosaic.version = 11 : i64} {
  func.func @main_model_kernel(%arg0: i32, %arg1: memref<16x32xbf16, #tpu.memory_space<vmem>>, %arg2: memref<32x128xbf16, #tpu.memory_space<vmem>>, %arg3: memref<1x128xf32, #tpu.memory_space<vmem>>, %arg4: memref<3x128x128xbf16, #tpu.memory_space<vmem>>, %arg5: memref<3x1x128xf32, #tpu.memory_space<vmem>>, %arg6: memref<128x128xbf16, #tpu.memory_space<vmem>>, %arg7: memref<1x128xf32, #tpu.memory_space<vmem>>, %arg8: memref<1x128xf32, #tpu.memory_space<vmem>>, %arg9: memref<1x1xf32, #tpu.memory_space<vmem>>, %arg10: memref<16x1xf32, #tpu.memory_space<vmem>>) attributes {dimension_semantics = [#tpu.dimension_semantics<parallel>], iteration_bounds = array<i64: 1>, scalar_prefetch = 0 : i64, scratch_operands = 0 : i64, tpu.core_type = #tpu.core_type<tc>, window_params = [{transform_indices = @transform_0, window_bounds = array<i64: 16, 32>}, {pipeline_mode = #tpu.pipeline_mode<synchronous>, transform_indices = @transform_1, window_bounds = array<i64: 32, 128>}, {pipeline_mode = #tpu.pipeline_mode<synchronous>, transform_indices = @transform_2, window_bounds = array<i64: 1, 128>}, {pipeline_mode = #tpu.pipeline_mode<synchronous>, transform_indices = @transform_3, window_bounds = array<i64: 3, 128, 128>}, {pipeline_mode = #tpu.pipeline_mode<synchronous>, transform_indices = @transform_4, window_bounds = array<i64: 3, 1, 128>}, {pipeline_mode = #tpu.pipeline_mode<synchronous>, transform_indices = @transform_5, window_bounds = array<i64: 128, 128>}, {pipeline_mode = #tpu.pipeline_mode<synchronous>, transform_indices = @transform_6, window_bounds = array<i64: 1, 128>}, {pipeline_mode = #tpu.pipeline_mode<synchronous>, transform_indices = @transform_7, window_bounds = array<i64: 1, 128>}, {pipeline_mode = #tpu.pipeline_mode<synchronous>, transform_indices = @transform_8, window_bounds = array<i64: 1, 1>}, {transform_indices = @transform_9, window_bounds = array<i64: 16, 1>}]} {
    %c0 = arith.constant 0 : index
    %c0_0 = arith.constant 0 : index
    %0 = vector.load %arg1[%c0, %c0_0] : memref<16x32xbf16, #tpu.memory_space<vmem>>, vector<16x32xbf16>
    %c0_1 = arith.constant 0 : index
    %c0_2 = arith.constant 0 : index
    %1 = vector.load %arg2[%c0_1, %c0_2] : memref<32x128xbf16, #tpu.memory_space<vmem>>, vector<32x128xbf16>
    %cst = arith.constant dense<0.000000e+00> : vector<16x128xf32>
    %2 = tpu.matmul %0, %1, %cst {dimension_numbers = #tpu.dot_dimension_numbers<[1], [0], [0], [1], [0, 0, 1, 1], [], []>} : vector<16x32xbf16>, vector<32x128xbf16>, vector<16x128xf32> -> vector<16x128xf32>
    %c0_3 = arith.constant 0 : index
    %c0_4 = arith.constant 0 : index
    %3 = vector.load %arg3[%c0_3, %c0_4] : memref<1x128xf32, #tpu.memory_space<vmem>>, vector<1x128xf32>
    %4 = vector.broadcast %3 : vector<1x128xf32> to vector<16x128xf32>
    %5 = arith.addf %2, %4 : vector<16x128xf32>
    %cst_5 = arith.constant 0.000000e+00 : f32
    %6 = vector.broadcast %cst_5 : f32 to vector<16x128xf32>
    %7 = arith.maximumf %5, %6 : vector<16x128xf32>
    %8 = arith.truncf %7 : vector<16x128xf32> to vector<16x128xbf16>
    %c0_6 = arith.constant 0 : index
    %c0_7 = arith.constant 0 : index
    %c0_8 = arith.constant 0 : index
    %9 = vector.load %arg4[%c0_6, %c0_7, %c0_8] : memref<3x128x128xbf16, #tpu.memory_space<vmem>>, vector<1x128x128xbf16>
    %10 = vector.shape_cast %9 : vector<1x128x128xbf16> to vector<128x128xbf16>
    %cst_9 = arith.constant dense<0.000000e+00> : vector<16x128xf32>
    %11 = tpu.matmul %8, %10, %cst_9 {dimension_numbers = #tpu.dot_dimension_numbers<[1], [0], [0], [1], [0, 0, 1, 1], [], []>} : vector<16x128xbf16>, vector<128x128xbf16>, vector<16x128xf32> -> vector<16x128xf32>
    %c0_10 = arith.constant 0 : index
    %c0_11 = arith.constant 0 : index
    %c0_12 = arith.constant 0 : index
    %12 = vector.load %arg5[%c0_10, %c0_11, %c0_12] : memref<3x1x128xf32, #tpu.memory_space<vmem>>, vector<1x1x128xf32>
    %13 = vector.shape_cast %12 : vector<1x1x128xf32> to vector<1x128xf32>
    %14 = vector.broadcast %13 : vector<1x128xf32> to vector<16x128xf32>
    %15 = arith.addf %11, %14 : vector<16x128xf32>
    %cst_13 = arith.constant 0.000000e+00 : f32
    %16 = vector.broadcast %cst_13 : f32 to vector<16x128xf32>
    %17 = arith.maximumf %15, %16 : vector<16x128xf32>
    %18 = arith.truncf %17 : vector<16x128xf32> to vector<16x128xbf16>
    %c1 = arith.constant 1 : index
    %c0_14 = arith.constant 0 : index
    %c0_15 = arith.constant 0 : index
    %19 = vector.load %arg4[%c1, %c0_14, %c0_15] : memref<3x128x128xbf16, #tpu.memory_space<vmem>>, vector<1x128x128xbf16>
    %20 = vector.shape_cast %19 : vector<1x128x128xbf16> to vector<128x128xbf16>
    %cst_16 = arith.constant dense<0.000000e+00> : vector<16x128xf32>
    %21 = tpu.matmul %18, %20, %cst_16 {dimension_numbers = #tpu.dot_dimension_numbers<[1], [0], [0], [1], [0, 0, 1, 1], [], []>} : vector<16x128xbf16>, vector<128x128xbf16>, vector<16x128xf32> -> vector<16x128xf32>
    %c1_17 = arith.constant 1 : index
    %c0_18 = arith.constant 0 : index
    %c0_19 = arith.constant 0 : index
    %22 = vector.load %arg5[%c1_17, %c0_18, %c0_19] : memref<3x1x128xf32, #tpu.memory_space<vmem>>, vector<1x1x128xf32>
    %23 = vector.shape_cast %22 : vector<1x1x128xf32> to vector<1x128xf32>
    %24 = vector.broadcast %23 : vector<1x128xf32> to vector<16x128xf32>
    %25 = arith.addf %21, %24 : vector<16x128xf32>
    %cst_20 = arith.constant 0.000000e+00 : f32
    %26 = vector.broadcast %cst_20 : f32 to vector<16x128xf32>
    %27 = arith.maximumf %25, %26 : vector<16x128xf32>
    %28 = arith.truncf %27 : vector<16x128xf32> to vector<16x128xbf16>
    %c2 = arith.constant 2 : index
    %c0_21 = arith.constant 0 : index
    %c0_22 = arith.constant 0 : index
    %29 = vector.load %arg4[%c2, %c0_21, %c0_22] : memref<3x128x128xbf16, #tpu.memory_space<vmem>>, vector<1x128x128xbf16>
    %30 = vector.shape_cast %29 : vector<1x128x128xbf16> to vector<128x128xbf16>
    %cst_23 = arith.constant dense<0.000000e+00> : vector<16x128xf32>
    %31 = tpu.matmul %28, %30, %cst_23 {dimension_numbers = #tpu.dot_dimension_numbers<[1], [0], [0], [1], [0, 0, 1, 1], [], []>} : vector<16x128xbf16>, vector<128x128xbf16>, vector<16x128xf32> -> vector<16x128xf32>
    %c2_24 = arith.constant 2 : index
    %c0_25 = arith.constant 0 : index
    %c0_26 = arith.constant 0 : index
    %32 = vector.load %arg5[%c2_24, %c0_25, %c0_26] : memref<3x1x128xf32, #tpu.memory_space<vmem>>, vector<1x1x128xf32>
    %33 = vector.shape_cast %32 : vector<1x1x128xf32> to vector<1x128xf32>
    %34 = vector.broadcast %33 : vector<1x128xf32> to vector<16x128xf32>
    %35 = arith.addf %31, %34 : vector<16x128xf32>
    %cst_27 = arith.constant 0.000000e+00 : f32
    %36 = vector.broadcast %cst_27 : f32 to vector<16x128xf32>
    %37 = arith.maximumf %35, %36 : vector<16x128xf32>
    %38 = arith.truncf %37 : vector<16x128xf32> to vector<16x128xbf16>
    %c0_28 = arith.constant 0 : index
    %c0_29 = arith.constant 0 : index
    %39 = vector.load %arg6[%c0_28, %c0_29] : memref<128x128xbf16, #tpu.memory_space<vmem>>, vector<128x128xbf16>
    %cst_30 = arith.constant dense<0.000000e+00> : vector<16x128xf32>
    %40 = tpu.matmul %38, %39, %cst_30 {dimension_numbers = #tpu.dot_dimension_numbers<[1], [0], [0], [1], [0, 0, 1, 1], [], []>} : vector<16x128xbf16>, vector<128x128xbf16>, vector<16x128xf32> -> vector<16x128xf32>
    %c0_31 = arith.constant 0 : index
    %c0_32 = arith.constant 0 : index
    %41 = vector.load %arg7[%c0_31, %c0_32] : memref<1x128xf32, #tpu.memory_space<vmem>>, vector<1x128xf32>
    %42 = vector.broadcast %41 : vector<1x128xf32> to vector<16x128xf32>
    %43 = arith.addf %40, %42 : vector<16x128xf32>
    %cst_33 = arith.constant 0.000000e+00 : f32
    %44 = vector.broadcast %cst_33 : f32 to vector<16x128xf32>
    %45 = arith.maximumf %43, %44 : vector<16x128xf32>
    %c0_34 = arith.constant 0 : index
    %c0_35 = arith.constant 0 : index
    %46 = vector.load %arg8[%c0_34, %c0_35] : memref<1x128xf32, #tpu.memory_space<vmem>>, vector<1x128xf32>
    %47 = vector.broadcast %46 : vector<1x128xf32> to vector<16x128xf32>
    %48 = arith.mulf %45, %47 : vector<16x128xf32>
    %cst_36 = arith.constant dense<0.000000e+00> : vector<16xf32>
    %49 = vector.multi_reduction <add>, %48, %cst_36 [1] : vector<16x128xf32> to vector<16xf32>
    %50 = vector.shape_cast %49 : vector<16xf32> to vector<16x1xf32>
    %c0_37 = arith.constant 0 : index
    %c0_38 = arith.constant 0 : index
    %51 = vector.load %arg9[%c0_37, %c0_38] : memref<1x1xf32, #tpu.memory_space<vmem>>, vector<1x1xf32>
    %52 = vector.broadcast %51 : vector<1x1xf32> to vector<16x1xf32>
    %53 = arith.addf %50, %52 : vector<16x1xf32>
    %c0_39 = arith.constant 0 : index
    %c0_40 = arith.constant 0 : index
    %54 = vector.load %arg10[%c0_39, %c0_40] : memref<16x1xf32, #tpu.memory_space<vmem>>, vector<16x1xf32>
    tpu.vector_store %arg10[%c0_39, %c0_40], %53 {strides = array<i32>} : memref<16x1xf32, #tpu.memory_space<vmem>>, vector<16x1xf32>,
    return
  }
  func.func @transform_0(%arg0: i32) -> (i32, i32) {
    %c0_i32 = arith.constant 0 : i32
    %c0_i32_0 = arith.constant 0 : i32
    return %arg0, %c0_i32 : i32, i32
  }
  func.func @transform_1(%arg0: i32) -> (i32, i32) {
    %c0_i32 = arith.constant 0 : i32
    %c0_i32_0 = arith.constant 0 : i32
    %c0_i32_1 = arith.constant 0 : i32
    return %c0_i32, %c0_i32_0 : i32, i32
  }
  func.func @transform_2(%arg0: i32) -> (i32, i32) {
    %c0_i32 = arith.constant 0 : i32
    %c0_i32_0 = arith.constant 0 : i32
    %c0_i32_1 = arith.constant 0 : i32
    return %c0_i32, %c0_i32_0 : i32, i32
  }
  func.func @transform_3(%arg0: i32) -> (i32, i32, i32) {
    %c0_i32 = arith.constant 0 : i32
    %c0_i32_0 = arith.constant 0 : i32
    %c0_i32_1 = arith.constant 0 : i32
    %c0_i32_2 = arith.constant 0 : i32
    return %c0_i32, %c0_i32_0, %c0_i32_1 : i32, i32, i32
  }
  func.func @transform_4(%arg0: i32) -> (i32, i32, i32) {
    %c0_i32 = arith.constant 0 : i32
    %c0_i32_0 = arith.constant 0 : i32
    %c0_i32_1 = arith.constant 0 : i32
    %c0_i32_2 = arith.constant 0 : i32
    return %c0_i32, %c0_i32_0, %c0_i32_1 : i32, i32, i32
  }
  func.func @transform_5(%arg0: i32) -> (i32, i32) {
    %c0_i32 = arith.constant 0 : i32
    %c0_i32_0 = arith.constant 0 : i32
    %c0_i32_1 = arith.constant 0 : i32
    return %c0_i32, %c0_i32_0 : i32, i32
  }
  func.func @transform_6(%arg0: i32) -> (i32, i32) {
    %c0_i32 = arith.constant 0 : i32
    %c0_i32_0 = arith.constant 0 : i32
    %c0_i32_1 = arith.constant 0 : i32
    return %c0_i32, %c0_i32_0 : i32, i32
  }
  func.func @transform_7(%arg0: i32) -> (i32, i32) {
    %c0_i32 = arith.constant 0 : i32
    %c0_i32_0 = arith.constant 0 : i32
    %c0_i32_1 = arith.constant 0 : i32
    return %c0_i32, %c0_i32_0 : i32, i32
  }
  func.func @transform_8(%arg0: i32) -> (i32, i32) {
    %c0_i32 = arith.constant 0 : i32
    %c0_i32_0 = arith.constant 0 : i32
    %c0_i32_1 = arith.constant 0 : i32
    return %c0_i32, %c0_i32_0 : i32, i32
  }
  func.func @transform_9(%arg0: i32) -> (i32, i32) {
    %c0_i32 = arith.constant 0 : i32
    %c0_i32_0 = arith.constant 0 : i32
    return %arg0, %c0_i32 : i32, i32
  }
}

</mosaic_0001>

<llo_original>
// kernel: main_model_forward.1
$region0: #{main_model_forward.1}
  #allocation0 [shape = 'u32[]', space=smem, size = 0x4, offset = 0x4, fixed_abs, tag = 'smem constant byte address 0x4 - core index']
  #allocation1 [shape = 'u32[144,128]{1,0:T(1,128)}', space=vmem, size = 0x12000, scoped, tag = 'internal scratch']
  #allocation2 [shape = 'f32[1,1]{1,0:T(1,128)S(1)}', space=vmem, size = 0x200, scoped, tag = 'scoped memory for main_model_forward.1']
  %s0 = inlined_call_operand.vmem [shape: bf16[16,32], index: 0, kind: input, shape index: {}]
  %s1 = inlined_call_operand.vmem [shape: bf16[32,128], index: 1, kind: input, shape index: {}]
  %s2 = inlined_call_operand.vmem [shape: f32[1,128], index: 2, kind: input, shape index: {}]
  %s3 = inlined_call_operand.hbm [shape: bf16[3,128,128], index: 3, kind: input, shape index: {}]
  %s4 = inlined_call_operand.vmem [shape: f32[3,1,128], index: 4, kind: input, shape index: {}]
  %s5 = inlined_call_operand.hbm [shape: bf16[128,128], index: 5, kind: input, shape index: {}]
  %s6 = inlined_call_operand.vmem [shape: f32[1,128], index: 6, kind: input, shape index: {}]
  %s7 = inlined_call_operand.vmem [shape: f32[1,128], index: 7, kind: input, shape index: {}]
  %s8 = inlined_call_operand.<no memory space> [shape: f32[1,1], index: 8, kind: input, shape index: {}]
  %s9 = inlined_call_operand.vmem [shape: f32[16,1], index: 9, kind: output, shape index: {}]
  %s10 = sld [smem:[#allocation0]]
  $region54: #{main_model_forward.1} parent=0
    _
  %s12 = ssub.s32 1, %s10
  %s13 = scalar_select 0, %s12, %s10
  %v14 = vstv %s8
  %15 = vst [vmem:[#allocation2] sm:$0x1] %v14
  $region1: #{main_model_forward.1} parent=0
    #allocation3 [shape = 'u8[98304]{0}', space=vmem, size = 0x18000, scoped, tag = 'input window, operand 3, single buffered']
    #allocation4 [shape = 's32[1]{0}', space=sflag, size = 0x4, scoped, tag = 'scoped memory for main_model_forward.1']
    #allocation5 [shape = 'u8[32768]{0}', space=vmem, size = 0x8000, scoped, tag = 'input window, operand 5, single buffered']
    #allocation6 [shape = 's32[1]{0}', space=sflag, size = 0x4, scoped, tag = 'scoped memory for main_model_forward.1']
    %16 = vsyncpa [#allocation4], 0
    %17 = vsyncpa [#allocation6], 0
    // Predicated region
    $region2: #{main_model_forward.1} parent=1 // pred_check
      _
    $region3: #{main_model_forward.1} parent=1 // pred_check_branch
      %19 = sbr.rel (0) target = $region5
    $region4: #{main_model_forward.1} parent=1 // pred_region
      _
    $region5: #{main_model_forward.1} parent=1 // pred_fallthru
      _
    // Predicated region
    $region6: #{main_model_forward.1} parent=1 // pred_check
      _
    $region7: #{main_model_forward.1} parent=1 // pred_check_branch
      %21 = sbr.rel (0) target = $region9
    $region8: #{main_model_forward.1} parent=1 // pred_region
      _
    $region9: #{main_model_forward.1} parent=1 // pred_fallthru
      _
    // Predicated region
    $region10: #{main_model_forward.1} parent=1 // pred_check
      _
    $region11: #{main_model_forward.1} parent=1 // pred_check_branch
      %23 = sbr.rel (0) target = $region13
    $region12: #{main_model_forward.1} parent=1 // pred_region
      _
    $region13: #{main_model_forward.1} parent=1 // pred_fallthru
      _
    // Predicated region
    $region14: #{main_model_forward.1} parent=1 // pred_check
      _
    $region15: #{main_model_forward.1} parent=1 // pred_check_branch
      %25 = sbr.rel (0) target = $region17
    $region16: #{main_model_forward.1} parent=1 // pred_region
      %s27 = ssub.s32 3072, 3072
      %28 = vsyncadd [#allocation4], %s27
      %s29 = sshll.u32 [#allocation3], 4
      %s30 = int_to_ptr.vmem [resolvable:$true] %s29
      %35 = dma.hbm_to_vmem [thread:$0]  %s3, 3072, %s30, [#allocation4], 64, 64, 4
    $region17: #{main_model_forward.1} parent=1 // pred_fallthru
      _
    // Predicated region
    $region18: #{main_model_forward.1} parent=1 // pred_check
      _
    $region19: #{main_model_forward.1} parent=1 // pred_check_branch
      %37 = sbr.rel (0) target = $region21
    $region20: #{main_model_forward.1} parent=1 // pred_region
      _
    $region21: #{main_model_forward.1} parent=1 // pred_fallthru
      _
    // Predicated region
    $region22: #{main_model_forward.1} parent=1 // pred_check
      _
    $region23: #{main_model_forward.1} parent=1 // pred_check_branch
      %39 = sbr.rel (0) target = $region25
    $region24: #{main_model_forward.1} parent=1 // pred_region
      %s41 = ssub.s32 1024, 1024
      %42 = vsyncadd [#allocation6], %s41
      %s43 = sshll.u32 [#allocation5], 4
      %s44 = int_to_ptr.vmem [resolvable:$true] %s43
      %49 = dma.hbm_to_vmem [thread:$0]  %s5, 1024, %s44, [#allocation6], 64, 64, 4
    $region25: #{main_model_forward.1} parent=1 // pred_fallthru
      _
    // Predicated region
    $region26: #{main_model_forward.1} parent=1 // pred_check
      _
    $region27: #{main_model_forward.1} parent=1 // pred_check_branch
      %51 = sbr.rel (0) target = $region29
    $region28: #{main_model_forward.1} parent=1 // pred_region
      _
    $region29: #{main_model_forward.1} parent=1 // pred_fallthru
      _
    // Predicated region
    $region30: #{main_model_forward.1} parent=1 // pred_check
      _
    $region31: #{main_model_forward.1} parent=1 // pred_check_branch
      %53 = sbr.rel (0) target = $region33
    $region32: #{main_model_forward.1} parent=1 // pred_region
      _
    $region33: #{main_model_forward.1} parent=1 // pred_fallthru
      _
    // Predicated region
    $region34: #{main_model_forward.1} parent=1 // pred_check
      _
    $region35: #{main_model_forward.1} parent=1 // pred_check_branch
      %55 = sbr.rel (0) target = $region37
    $region36: #{main_model_forward.1} parent=1 // pred_region
      _
    $region37: #{main_model_forward.1} parent=1 // pred_fallthru
      _
    // Predicated region
    $region38: #{main_model_forward.1} parent=1 // pred_check
      _
    $region39: #{main_model_forward.1} parent=1 // pred_check_branch
      %57 = sbr.rel (0) target = $region41
    $region40: #{main_model_forward.1} parent=1 // pred_region
      %58 = dma.done [#allocation4], 3072
    $region41: #{main_model_forward.1} parent=1 // pred_fallthru
      _
    // Predicated region
    $region42: #{main_model_forward.1} parent=1 // pred_check
      _
    $region43: #{main_model_forward.1} parent=1 // pred_check_branch
      %60 = sbr.rel (0) target = $region45
    $region44: #{main_model_forward.1} parent=1 // pred_region
      %61 = dma.done [#allocation6], 1024
    $region45: #{main_model_forward.1} parent=1 // pred_fallthru
      _
    %v63 = vld [vmem:[%s0] sm:$0xf]
    %v64 = vld [vmem:[%s0 + $0x4] sm:$0xf]
    %v65 = vld [vmem:[%s1] sm:$0xf]
    %v66 = vld [vmem:[%s1 + $0x4] sm:$0xf]
    %v67 = vld [vmem:[%s1 + $0x8] sm:$0xf]
    %v68 = vld [vmem:[%s1 + $0xc] sm:$0xf]
    %v69 = vld [vmem:[%s2] sm:$0x1]
    %v71 = vlaneseq
    %v72 = vshrl.u32 %v71, 7
    %v73 = vsub.s32 0, %v72
    %v74 = vrot.slane %v69, %v73
    %v78 = vunpack.c.l.b16 %v63
    %v79 = vunpack.c.l.b16 %v64
    %v80 = vpack.c.b16 %v79, %v78
    %v85 = vunpack.c.l.b16 %v65
    %v86 = vunpack.c.l.b16 %v66
    %v87 = vunpack.c.l.b16 %v67
    %v88 = vunpack.c.l.b16 %v68
    %v89 = vpack.c.b16 %v86, %v85
    %v90 = vpack.c.b16 %v88, %v87
    %vm93 = vcmask 261120
    %v95 = vsel %vm93, %v80, 0
    %97 = vmatprep.subr.bf16.mxu0 0
    %98 = vmatpush1.bf16.msra.mxu0 0
    %99 = vmatprep.subr.bf16.mxu0 0
    %100 = vmatpush1.bf16.msra.mxu0 0
    %101 = vmatprep.subr.bf16.mxu0 0
    %102 = vmatpush1.bf16.msra.mxu0 0
    %103 = vmatprep.subr.bf16.mxu0 0
    %104 = vmatpush1.bf16.msra.mxu0 0
    %105 = vmatprep.subr.bf16.mxu0 0
    %106 = vmatpush1.bf16.msra.mxu0 0
    %107 = vmatprep.subr.bf16.mxu0 0
    %108 = vmatpush1.bf16.msra.mxu0 0
    %109 = vmatprep.subr.bf16.mxu0 0
    %110 = vmatpush1.bf16.msra.mxu0 %v90
    %111 = vmatprep.subr.bf16.mxu0 0
    %112 = vmatpush1.bf16.msra.mxu0 %v89
    %113 = vmatprep.subr.bf16.mxu0 0
    %114 = vmatpush2.bf16.msra.mxu0 0
    %115 = vmatprep.subr.bf16.mxu0 0
    %116 = vmatpush2.bf16.msra.mxu0 0
    %117 = vmatprep.subr.bf16.mxu0 0
    %118 = vmatpush2.bf16.msra.mxu0 0
    %119 = vmatprep.subr.bf16.mxu0 0
    %120 = vmatpush2.bf16.msra.mxu0 0
    %121 = vmatprep.subr.bf16.mxu0 0
    %122 = vmatpush2.bf16.msra.mxu0 0
    %123 = vmatprep.subr.bf16.mxu0 0
    %124 = vmatpush2.bf16.msra.mxu0 0
    %125 = vmatprep.subr.bf16.mxu0 0
    %126 = vmatpush2.bf16.msra.mxu0 0
    %127 = vmatprep.subr.bf16.mxu0 0
    %128 = vmatpush2.bf16.msra.mxu0 0
    %129 = vmatprep.mubr.bf16.mxu0 0
    %130 = vmatmul.mubr.bf16.gmra.mxu0 %v95
    %v131 = vpop.f32.mrf.mxu0
    %v132 = vadd.f32 %v74, %v131
    %v133 = vpop.f32.mrf.mxu0
    %v134 = vpop.f32.mrf.mxu0
    %v135 = vadd.f32 %v74, %v134
    %v136 = vpop.f32.mrf.mxu0
    %137 = vdwg.mxu0
    %v138 = vmax.f32 %v132, 0.0
    %v139 = vmax.f32 %v135, 0.0
    %v140 = vpack.c.bf16 %v139, %v138
    %v141 = vld [vmem:[#allocation3] sm:$0xf]
    %v142 = vld [vmem:[#allocation3 + $0x4] sm:$0xf]
    %v143 = vld [vmem:[#allocation3 + $0x8] sm:$0xf]
    %v144 = vld [vmem:[#allocation3 + $0xc] sm:$0xf]
    %v145 = vld [vmem:[#allocation3 + $0x10] sm:$0xf]
    %v146 = vld [vmem:[#allocation3 + $0x14] sm:$0xf]
    %v147 = vld [vmem:[#allocation3 + $0x18] sm:$0xf]
    %v148 = vld [vmem:[#allocation3 + $0x1c] sm:$0xf]
    %v149 = vld [vmem:[#allocation3 + $0x20] sm:$0xf]
    %v150 = vld [vmem:[#allocation3 + $0x24] sm:$0xf]
    %v151 = vld [vmem:[#allocation3 + $0x28] sm:$0xf]
    %v152 = vld [vmem:[#allocation3 + $0x2c] sm:$0xf]
    %v153 = vld [vmem:[#allocation3 + $0x30] sm:$0xf]
    %v154 = vld [vmem:[#allocation3 + $0x34] sm:$0xf]
    %v155 = vld [vmem:[#allocation3 + $0x38] sm:$0xf]
    %v156 = vld [vmem:[#allocation3 + $0x3c] sm:$0xf]
    %v157 = vld [vmem:[%s4] sm:$0x1]
    %v159 = vlaneseq
    %v160 = vshrl.u32 %v159, 7
    %v161 = vsub.s32 0, %v160
    %v162 = vrot.slane %v157, %v161
    %v180 = vunpack.c.l.b16 %v141
    %v181 = vunpack.c.l.b16 %v142
    %v182 = vunpack.c.l.b16 %v143
    %v183 = vunpack.c.l.b16 %v144
    %v184 = vunpack.c.l.b16 %v145
    %v185 = vunpack.c.l.b16 %v146
    %v186 = vunpack.c.l.b16 %v147
    %v187 = vunpack.c.l.b16 %v148
    %v188 = vunpack.c.l.b16 %v149
    %v189 = vunpack.c.l.b16 %v150
    %v190 = vunpack.c.l.b16 %v151
    %v191 = vunpack.c.l.b16 %v152
    %v192 = vunpack.c.l.b16 %v153
    %v193 = vunpack.c.l.b16 %v154
    %v194 = vunpack.c.l.b16 %v155
    %v195 = vunpack.c.l.b16 %v156
    %v196 = vpack.c.b16 %v181, %v180
    %v197 = vpack.c.b16 %v183, %v182
    %v198 = vpack.c.b16 %v185, %v184
    %v199 = vpack.c.b16 %v187, %v186
    %v200 = vpack.c.b16 %v189, %v188
    %v201 = vpack.c.b16 %v191, %v190
    %v202 = vpack.c.b16 %v193, %v192
    %v203 = vpack.c.b16 %v195, %v194
    %212 = vmatprep.subr.bf16.mxu0 0
    %213 = vmatpush1.bf16.msra.mxu0 %v203
    %214 = vmatprep.subr.bf16.mxu0 0
    %215 = vmatpush1.bf16.msra.mxu0 %v202
    %216 = vmatprep.subr.bf16.mxu0 0
    %217 = vmatpush1.bf16.msra.mxu0 %v201
    %218 = vmatprep.subr.bf16.mxu0 0
    %219 = vmatpush1.bf16.msra.mxu0 %v200
    %220 = vmatprep.subr.bf16.mxu0 0
    %221 = vmatpush1.bf16.msra.mxu0 %v199
    %222 = vmatprep.subr.bf16.mxu0 0
    %223 = vmatpush1.bf16.msra.mxu0 %v198
    %224 = vmatprep.subr.bf16.mxu0 0
    %225 = vmatpush1.bf16.msra.mxu0 %v197
    %226 = vmatprep.subr.bf16.mxu0 0
    %227 = vmatpush1.bf16.msra.mxu0 %v196
    %228 = vmatprep.subr.bf16.mxu0 0
    %229 = vmatpush2.bf16.msra.mxu0 0
    %230 = vmatprep.subr.bf16.mxu0 0
    %231 = vmatpush2.bf16.msra.mxu0 0
    %232 = vmatprep.subr.bf16.mxu0 0
    %233 = vmatpush2.bf16.msra.mxu0 0
    %234 = vmatprep.subr.bf16.mxu0 0
    %235 = vmatpush2.bf16.msra.mxu0 0
    %236 = vmatprep.subr.bf16.mxu0 0
    %237 = vmatpush2.bf16.msra.mxu0 0
    %238 = vmatprep.subr.bf16.mxu0 0
    %239 = vmatpush2.bf16.msra.mxu0 0
    %240 = vmatprep.subr.bf16.mxu0 0
    %241 = vmatpush2.bf16.msra.mxu0 0
    %242 = vmatprep.subr.bf16.mxu0 0
    %243 = vmatpush2.bf16.msra.mxu0 0
    %244 = vmatprep.mubr.bf16.mxu0 0
    %245 = vmatmul.mubr.bf16.gmra.mxu0 %v140
    %v246 = vpop.f32.mrf.mxu0
    %v247 = vadd.f32 %v162, %v246
    %v248 = vpop.f32.mrf.mxu0
    %v249 = vpop.f32.mrf.mxu0
    %v250 = vadd.f32 %v162, %v249
    %v251 = vpop.f32.mrf.mxu0
    %252 = vdwg.mxu0
    %v253 = vmax.f32 %v247, 0.0
    %v254 = vmax.f32 %v250, 0.0
    %v255 = vpack.c.bf16 %v254, %v253
    %s256 = scalar_lea.vmem [#allocation3], 64
    %v257 = vld [vmem:[%s256] sm:$0xf]
    %v258 = vld [vmem:[%s256 + $0x4] sm:$0xf]
    %v259 = vld [vmem:[%s256 + $0x8] sm:$0xf]
    %v260 = vld [vmem:[%s256 + $0xc] sm:$0xf]
    %v261 = vld [vmem:[%s256 + $0x10] sm:$0xf]
    %v262 = vld [vmem:[%s256 + $0x14] sm:$0xf]
    %v263 = vld [vmem:[%s256 + $0x18] sm:$0xf]
    %v264 = vld [vmem:[%s256 + $0x1c] sm:$0xf]
    %v265 = vld [vmem:[%s256 + $0x20] sm:$0xf]
    %v266 = vld [vmem:[%s256 + $0x24] sm:$0xf]
    %v267 = vld [vmem:[%s256 + $0x28] sm:$0xf]
    %v268 = vld [vmem:[%s256 + $0x2c] sm:$0xf]
    %v269 = vld [vmem:[%s256 + $0x30] sm:$0xf]
    %v270 = vld [vmem:[%s256 + $0x34] sm:$0xf]
    %v271 = vld [vmem:[%s256 + $0x38] sm:$0xf]
    %v272 = vld [vmem:[%s256 + $0x3c] sm:$0xf]
    %s273 = scalar_lea.vmem %s4, 1
    %v274 = vld [vmem:[%s273] sm:$0x1]
    %v276 = vlaneseq
    %v277 = vshrl.u32 %v276, 7
    %v278 = vsub.s32 0, %v277
    %v279 = vrot.slane %v274, %v278
    %v297 = vunpack.c.l.b16 %v257
    %v298 = vunpack.c.l.b16 %v258
    %v299 = vunpack.c.l.b16 %v259
    %v300 = vunpack.c.l.b16 %v260
    %v301 = vunpack.c.l.b16 %v261
    %v302 = vunpack.c.l.b16 %v262
    %v303 = vunpack.c.l.b16 %v263
    %v304 = vunpack.c.l.b16 %v264
    %v305 = vunpack.c.l.b16 %v265
    %v306 = vunpack.c.l.b16 %v266
    %v307 = vunpack.c.l.b16 %v267
    %v308 = vunpack.c.l.b16 %v268
    %v309 = vunpack.c.l.b16 %v269
    %v310 = vunpack.c.l.b16 %v270
    %v311 = vunpack.c.l.b16 %v271
    %v312 = vunpack.c.l.b16 %v272
    %v313 = vpack.c.b16 %v298, %v297
    %v314 = vpack.c.b16 %v300, %v299
    %v315 = vpack.c.b16 %v302, %v301
    %v316 = vpack.c.b16 %v304, %v303
    %v317 = vpack.c.b16 %v306, %v305
    %v318 = vpack.c.b16 %v308, %v307
    %v319 = vpack.c.b16 %v310, %v309
    %v320 = vpack.c.b16 %v312, %v311
    %329 = vmatprep.subr.bf16.mxu0 0
    %330 = vmatpush1.bf16.msra.mxu0 %v320
    %331 = vmatprep.subr.bf16.mxu0 0
    %332 = vmatpush1.bf16.msra.mxu0 %v319
    %333 = vmatprep.subr.bf16.mxu0 0
    %334 = vmatpush1.bf16.msra.mxu0 %v318
    %335 = vmatprep.subr.bf16.mxu0 0
    %336 = vmatpush1.bf16.msra.mxu0 %v317
    %337 = vmatprep.subr.bf16.mxu0 0
    %338 = vmatpush1.bf16.msra.mxu0 %v316
    %339 = vmatprep.subr.bf16.mxu0 0
    %340 = vmatpush1.bf16.msra.mxu0 %v315
    %341 = vmatprep.subr.bf16.mxu0 0
    %342 = vmatpush1.bf16.msra.mxu0 %v314
    %343 = vmatprep.subr.bf16.mxu0 0
    %344 = vmatpush1.bf16.msra.mxu0 %v313
    %345 = vmatprep.subr.bf16.mxu0 0
    %346 = vmatpush2.bf16.msra.mxu0 0
    %347 = vmatprep.subr.bf16.mxu0 0
    %348 = vmatpush2.bf16.msra.mxu0 0
    %349 = vmatprep.subr.bf16.mxu0 0
    %350 = vmatpush2.bf16.msra.mxu0 0
    %351 = vmatprep.subr.bf16.mxu0 0
    %352 = vmatpush2.bf16.msra.mxu0 0
    %353 = vmatprep.subr.bf16.mxu0 0
    %354 = vmatpush2.bf16.msra.mxu0 0
    %355 = vmatprep.subr.bf16.mxu0 0
    %356 = vmatpush2.bf16.msra.mxu0 0
    %357 = vmatprep.subr.bf16.mxu0 0
    %358 = vmatpush2.bf16.msra.mxu0 0
    %359 = vmatprep.subr.bf16.mxu0 0
    %360 = vmatpush2.bf16.msra.mxu0 0
    %361 = vmatprep.mubr.bf16.mxu0 0
    %362 = vmatmul.mubr.bf16.gmra.mxu0 %v255
    %v363 = vpop.f32.mrf.mxu0
    %v364 = vadd.f32 %v279, %v363
    %v365 = vpop.f32.mrf.mxu0
    %v366 = vpop.f32.mrf.mxu0
    %v367 = vadd.f32 %v279, %v366
    %v368 = vpop.f32.mrf.mxu0
    %369 = vdwg.mxu0
    %v370 = vmax.f32 %v364, 0.0
    %v371 = vmax.f32 %v367, 0.0
    %v372 = vpack.c.bf16 %v371, %v370
    %s373 = scalar_lea.vmem [#allocation3], 128
    %v374 = vld [vmem:[%s373] sm:$0xf]
    %v375 = vld [vmem:[%s373 + $0x4] sm:$0xf]
    %v376 = vld [vmem:[%s373 + $0x8] sm:$0xf]
    %v377 = vld [vmem:[%s373 + $0xc] sm:$0xf]
    %v378 = vld [vmem:[%s373 + $0x10] sm:$0xf]
    %v379 = vld [vmem:[%s373 + $0x14] sm:$0xf]
    %v380 = vld [vmem:[%s373 + $0x18] sm:$0xf]
    %v381 = vld [vmem:[%s373 + $0x1c] sm:$0xf]
    %v382 = vld [vmem:[%s373 + $0x20] sm:$0xf]
    %v383 = vld [vmem:[%s373 + $0x24] sm:$0xf]
    %v384 = vld [vmem:[%s373 + $0x28] sm:$0xf]
    %v385 = vld [vmem:[%s373 + $0x2c] sm:$0xf]
    %v386 = vld [vmem:[%s373 + $0x30] sm:$0xf]
    %v387 = vld [vmem:[%s373 + $0x34] sm:$0xf]
    %v388 = vld [vmem:[%s373 + $0x38] sm:$0xf]
    %v389 = vld [vmem:[%s373 + $0x3c] sm:$0xf]
    %s390 = scalar_lea.vmem %s4, 2
    %v391 = vld [vmem:[%s390] sm:$0x1]
    %v393 = vlaneseq
    %v394 = vshrl.u32 %v393, 7
    %v395 = vsub.s32 0, %v394
    %v396 = vrot.slane %v391, %v395
    %v414 = vunpack.c.l.b16 %v374
    %v415 = vunpack.c.l.b16 %v375
    %v416 = vunpack.c.l.b16 %v376
    %v417 = vunpack.c.l.b16 %v377
    %v418 = vunpack.c.l.b16 %v378
    %v419 = vunpack.c.l.b16 %v379
    %v420 = vunpack.c.l.b16 %v380
    %v421 = vunpack.c.l.b16 %v381
    %v422 = vunpack.c.l.b16 %v382
    %v423 = vunpack.c.l.b16 %v383
    %v424 = vunpack.c.l.b16 %v384
    %v425 = vunpack.c.l.b16 %v385
    %v426 = vunpack.c.l.b16 %v386
    %v427 = vunpack.c.l.b16 %v387
    %v428 = vunpack.c.l.b16 %v388
    %v429 = vunpack.c.l.b16 %v389
    %v430 = vpack.c.b16 %v415, %v414
    %v431 = vpack.c.b16 %v417, %v416
    %v432 = vpack.c.b16 %v419, %v418
    %v433 = vpack.c.b16 %v421, %v420
    %v434 = vpack.c.b16 %v423, %v422
    %v435 = vpack.c.b16 %v425, %v424
    %v436 = vpack.c.b16 %v427, %v426
    %v437 = vpack.c.b16 %v429, %v428
    %446 = vmatprep.subr.bf16.mxu0 0
    %447 = vmatpush1.bf16.msra.mxu0 %v437
    %448 = vmatprep.subr.bf16.mxu0 0
    %449 = vmatpush1.bf16.msra.mxu0 %v436
    %450 = vmatprep.subr.bf16.mxu0 0
    %451 = vmatpush1.bf16.msra.mxu0 %v435
    %452 = vmatprep.subr.bf16.mxu0 0
    %453 = vmatpush1.bf16.msra.mxu0 %v434
    %454 = vmatprep.subr.bf16.mxu0 0
    %455 = vmatpush1.bf16.msra.mxu0 %v433
    %456 = vmatprep.subr.bf16.mxu0 0
    %457 = vmatpush1.bf16.msra.mxu0 %v432
    %458 = vmatprep.subr.bf16.mxu0 0
    %459 = vmatpush1.bf16.msra.mxu0 %v431
    %460 = vmatprep.subr.bf16.mxu0 0
    %461 = vmatpush1.bf16.msra.mxu0 %v430
    %462 = vmatprep.subr.bf16.mxu0 0
    %463 = vmatpush2.bf16.msra.mxu0 0
    %464 = vmatprep.subr.bf16.mxu0 0
    %465 = vmatpush2.bf16.msra.mxu0 0
    %466 = vmatprep.subr.bf16.mxu0 0
    %467 = vmatpush2.bf16.msra.mxu0 0
    %468 = vmatprep.subr.bf16.mxu0 0
    %469 = vmatpush2.bf16.msra.mxu0 0
    %470 = vmatprep.subr.bf16.mxu0 0
    %471 = vmatpush2.bf16.msra.mxu0 0
    %472 = vmatprep.subr.bf16.mxu0 0
    %473 = vmatpush2.bf16.msra.mxu0 0
    %474 = vmatprep.subr.bf16.mxu0 0
    %475 = vmatpush2.bf16.msra.mxu0 0
    %476 = vmatprep.subr.bf16.mxu0 0
    %477 = vmatpush2.bf16.msra.mxu0 0
    %478 = vmatprep.mubr.bf16.mxu0 0
    %479 = vmatmul.mubr.bf16.gmra.mxu0 %v372
    %v480 = vpop.f32.mrf.mxu0
    %v481 = vadd.f32 %v396, %v480
    %v482 = vpop.f32.mrf.mxu0
    %v483 = vpop.f32.mrf.mxu0
    %v484 = vadd.f32 %v396, %v483
    %v485 = vpop.f32.mrf.mxu0
    %486 = vdwg.mxu0
    %v487 = vmax.f32 %v481, 0.0
    %v488 = vmax.f32 %v484, 0.0
    %v489 = vpack.c.bf16 %v488, %v487
    %v490 = vld [vmem:[#allocation5] sm:$0xf]
    %v491 = vld [vmem:[#allocation5 + $0x4] sm:$0xf]
    %v492 = vld [vmem:[#allocation5 + $0x8] sm:$0xf]
    %v493 = vld [vmem:[#allocation5 + $0xc] sm:$0xf]
    %v494 = vld [vmem:[#allocation5 + $0x10] sm:$0xf]
    %v495 = vld [vmem:[#allocation5 + $0x14] sm:$0xf]
    %v496 = vld [vmem:[#allocation5 + $0x18] sm:$0xf]
    %v497 = vld [vmem:[#allocation5 + $0x1c] sm:$0xf]
    %v498 = vld [vmem:[#allocation5 + $0x20] sm:$0xf]
    %v499 = vld [vmem:[#allocation5 + $0x24] sm:$0xf]
    %v500 = vld [vmem:[#allocation5 + $0x28] sm:$0xf]
    %v501 = vld [vmem:[#allocation5 + $0x2c] sm:$0xf]
    %v502 = vld [vmem:[#allocation5 + $0x30] sm:$0xf]
    %v503 = vld [vmem:[#allocation5 + $0x34] sm:$0xf]
    %v504 = vld [vmem:[#allocation5 + $0x38] sm:$0xf]
    %v505 = vld [vmem:[#allocation5 + $0x3c] sm:$0xf]
    %v506 = vld [vmem:[%s6] sm:$0x1]
    %v508 = vlaneseq
    %v509 = vshrl.u32 %v508, 7
    %v510 = vsub.s32 0, %v509
    %v511 = vrot.slane %v506, %v510
    %v529 = vunpack.c.l.b16 %v490
    %v530 = vunpack.c.l.b16 %v491
    %v531 = vunpack.c.l.b16 %v492
    %v532 = vunpack.c.l.b16 %v493
    %v533 = vunpack.c.l.b16 %v494
    %v534 = vunpack.c.l.b16 %v495
    %v535 = vunpack.c.l.b16 %v496
    %v536 = vunpack.c.l.b16 %v497
    %v537 = vunpack.c.l.b16 %v498
    %v538 = vunpack.c.l.b16 %v499
    %v539 = vunpack.c.l.b16 %v500
    %v540 = vunpack.c.l.b16 %v501
    %v541 = vunpack.c.l.b16 %v502
    %v542 = vunpack.c.l.b16 %v503
    %v543 = vunpack.c.l.b16 %v504
    %v544 = vunpack.c.l.b16 %v505
    %v545 = vpack.c.b16 %v530, %v529
    %v546 = vpack.c.b16 %v532, %v531
    %v547 = vpack.c.b16 %v534, %v533
    %v548 = vpack.c.b16 %v536, %v535
    %v549 = vpack.c.b16 %v538, %v537
    %v550 = vpack.c.b16 %v540, %v539
    %v551 = vpack.c.b16 %v542, %v541
    %v552 = vpack.c.b16 %v544, %v543
    %561 = vmatprep.subr.bf16.mxu0 0
    %562 = vmatpush1.bf16.msra.mxu0 %v552
    %563 = vmatprep.subr.bf16.mxu0 0
    %564 = vmatpush1.bf16.msra.mxu0 %v551
    %565 = vmatprep.subr.bf16.mxu0 0
    %566 = vmatpush1.bf16.msra.mxu0 %v550
    %567 = vmatprep.subr.bf16.mxu0 0
    %568 = vmatpush1.bf16.msra.mxu0 %v549
    %569 = vmatprep.subr.bf16.mxu0 0
    %570 = vmatpush1.bf16.msra.mxu0 %v548
    %571 = vmatprep.subr.bf16.mxu0 0
    %572 = vmatpush1.bf16.msra.mxu0 %v547
    %573 = vmatprep.subr.bf16.mxu0 0
    %574 = vmatpush1.bf16.msra.mxu0 %v546
    %575 = vmatprep.subr.bf16.mxu0 0
    %576 = vmatpush1.bf16.msra.mxu0 %v545
    %577 = vmatprep.subr.bf16.mxu0 0
    %578 = vmatpush2.bf16.msra.mxu0 0
    %579 = vmatprep.subr.bf16.mxu0 0
    %580 = vmatpush2.bf16.msra.mxu0 0
    %581 = vmatprep.subr.bf16.mxu0 0
    %582 = vmatpush2.bf16.msra.mxu0 0
    %583 = vmatprep.subr.bf16.mxu0 0
    %584 = vmatpush2.bf16.msra.mxu0 0
    %585 = vmatprep.subr.bf16.mxu0 0
    %586 = vmatpush2.bf16.msra.mxu0 0
    %587 = vmatprep.subr.bf16.mxu0 0
    %588 = vmatpush2.bf16.msra.mxu0 0
    %589 = vmatprep.subr.bf16.mxu0 0
    %590 = vmatpush2.bf16.msra.mxu0 0
    %591 = vmatprep.subr.bf16.mxu0 0
    %592 = vmatpush2.bf16.msra.mxu0 0
    %593 = vmatprep.mubr.bf16.mxu0 0
    %594 = vmatmul.mubr.bf16.gmra.mxu0 %v489
    %v595 = vpop.f32.mrf.mxu0
    %v596 = vadd.f32 %v511, %v595
    %v597 = vpop.f32.mrf.mxu0
    %v598 = vpop.f32.mrf.mxu0
    %v599 = vadd.f32 %v511, %v598
    %v600 = vpop.f32.mrf.mxu0
    %601 = vdwg.mxu0
    %v602 = vmax.f32 %v596, 0.0
    %v603 = vmax.f32 %v599, 0.0
    %v604 = vld [vmem:[%s7] sm:$0x1]
    %v606 = vlaneseq
    %v607 = vshrl.u32 %v606, 7
    %v608 = vsub.s32 0, %v607
    %v609 = vrot.slane %v604, %v608
    %v611 = vmul.f32 %v602, %v609
    %v612 = vmul.f32 %v603, %v609
    %613 = vadd.xlane.f32.xlu0 %v611
    %v614 = vpop.xlane.xlu0 %613
    %615 = vadd.xlane.f32.xlu0 %v612
    %v616 = vpop.xlane.xlu0 %615
    %v617 = vld [vmem:[#allocation2] sm:$0x1]
    %v619 = vlaneseq
    %v620 = vshrl.u32 %v619, 7
    %v621 = vsub.s32 0, %v620
    %v622 = vrot.slane %v617, %v621
    %v624 = vadd.f32 %v614, %v622
    %v625 = vadd.f32 %v616, %v622
    %vm626 = vcmask 7168
    %627 = vst.msk [vmem:[%s9] sm:$0xff] %vm626, %v624
    %628 = vst.msk [vmem:[%s9 + $0x8] sm:$0xff] %vm626, %v625
    // Predicated region
    $region46: #{main_model_forward.1} parent=1 // pred_check
      _
    $region47: #{main_model_forward.1} parent=1 // pred_check_branch
      %630 = sbr.rel (0) target = $region49
    $region48: #{main_model_forward.1} parent=1 // pred_region
      _
    $region49: #{main_model_forward.1} parent=1 // pred_fallthru
      _
    // Predicated region
    $region50: #{main_model_forward.1} parent=1 // pred_check
      _
    $region51: #{main_model_forward.1} parent=1 // pred_check_branch
      %632 = sbr.rel (0) target = $region53
    $region52: #{main_model_forward.1} parent=1 // pred_region
      _
    $region53: #{main_model_forward.1} parent=1 // pred_fallthru
      _
    %633 = vsyncpa [#allocation4], 1
    %634 = vsyncpa [#allocation6], 1

</llo_original>
